<compile_context>
chip_gen: v7x
topology: tpu7x:2x2x1
jax: 0.10.0
libtpu: 0.0.40
codegen_flags: <defaults>
</compile_context>

<pallas_src>
import math
import functools

import jax
import jax.numpy as jnp
from jax.experimental import pallas as pl
from jax.experimental.pallas import tpu as pltpu


# ----------------------------------------------------------------------------
# Parameter setup (equivalent of PositionEncoding.__init__)
# ----------------------------------------------------------------------------
def make_position_encoding_table(max_len: int, d_model: int) -> jnp.ndarray:
    """pe[pos, 2i] = sin(pos * exp(-2i/d * ln(1e4))); pe[pos, 2i+1] = cos(...)."""
    pos = jnp.arange(max_len, dtype=jnp.float32)[:, None]                      # (L, 1)
    expo = jnp.exp(
        jnp.arange(0, d_model, 2, dtype=jnp.float32) / d_model * math.log(10000.0) * -1.0
    )                                                                          # (D/2,)
    angles = pos * expo                                                        # (L, D/2)
    pe = jnp.zeros((max_len, d_model), dtype=jnp.float32)
    pe = pe.at[:, 0::2].set(jnp.sin(angles))
    pe = pe.at[:, 1::2].set(jnp.cos(angles))
    return pe


# ----------------------------------------------------------------------------
# Tile sizing helpers (keep tiles ~1 MiB, lane dim a multiple of 128)
# ----------------------------------------------------------------------------
def _largest_tile(total: int, unit: int, cap: int) -> int:
    """Largest t <= cap with t % unit == 0 and total % t == 0; else `total`."""
    if total <= cap:
        return total
    t = (min(cap, total) // unit) * unit
    while t >= unit:
        if total % t == 0:
            return t
        t -= unit
    return total


def _pick_tiles(batch: int, lanes: int, itemsize: int,
                target_tile_bytes: int = 1 << 20):
    tb = _largest_tile(batch, 8, 256)  # sublane (row) tile
    col_budget = max(128, (target_tile_bytes // (tb * itemsize)) // 128 * 128)
    tl = _largest_tile(lanes, 128, col_budget)  # lane tile over flattened S*D
    return tb, tl


# ----------------------------------------------------------------------------
# Pallas kernels (operate on flattened (rows, lanes) tiles)
# ----------------------------------------------------------------------------
def _pe_add_kernel(x_ref, pe_ref, o_ref):
    # eval-mode forward: x + pe (dropout is identity at inference)
    o_ref[...] = (x_ref[...].astype(jnp.float32) + pe_ref[...]).astype(o_ref.dtype)


def _pe_add_dropout_kernel(x_ref, pe_ref, bits_ref, o_ref, *, threshold, inv_keep):
    # training-mode forward: dropout(x + pe, p) with inverted scaling.
    # keep iff bits >= threshold  (P(drop) = threshold / 2^32 = p)
    # TODO(synk): on a TPU-only build, use pltpu.prng_seed/prng_random_bits
    # in-kernel to avoid streaming `bits` through HBM; those primitives have no
    # interpret/CPU lowering, so the mask bits are generated outside the kernel.
    y = x_ref[...].astype(jnp.float32) + pe_ref[...]
    keep = bits_ref[...] >= jnp.uint32(threshold)
    o_ref[...] = (jnp.where(keep, y, 0.0) * inv_keep).astype(o_ref.dtype)


# ----------------------------------------------------------------------------
# Wrapper (PositionEncoding.forward)
# ----------------------------------------------------------------------------
def position_encoding_forward(x, pe, *, drop_out: float = 0.1,
                              training: bool = False, seed: int = 0):
    """Pallas implementation of PositionEncoding.forward.

    x : (B, S, D) float array
    pe: (max_len, D) float32 positional-encoding table (S <= max_len)
    """
    B, S, D = x.shape
    L = S * D

    # Flatten so the kernel sees a lane-dense (rows=B, lanes=S*D) layout;
    # reshape of contiguous arrays is metadata-only glue, not the hot path.
    x_flat = x.reshape(B, L)
    pe_flat = pe[:S, :].astype(jnp.float32).reshape(1, L)

    tb, tl = _pick_tiles(B, L, x_flat.dtype.itemsize)
    grid = (L // tl, B // tb)  # lane-tile OUTER, batch-tile INNER -> pe reuse

    x_spec = pl.BlockSpec((tb, tl), lambda l, b: (b, l))
    pe_spec = pl.BlockSpec((1, tl), lambda l, b: (0, l))
    out_spec = pl.BlockSpec((tb, tl), lambda l, b: (b, l))
    out_shape = jax.ShapeDtypeStruct((B, L), x.dtype)
    cparams = pltpu.CompilerParams(dimension_semantics=("parallel", "parallel"))

    if (not training) or drop_out <= 0.0:
        out_flat = pl.pallas_call(
            _pe_add_kernel,
            out_shape=out_shape,
            grid=grid,
            in_specs=[x_spec, pe_spec],
            out_specs=out_spec,
            compiler_params=cparams,
        )(x_flat, pe_flat)
        return out_flat.reshape(B, S, D)

    # Training mode: dropout with inverted scaling.
    p = float(drop_out)
    threshold = min(int(round(p * (1 << 32))), (1 << 32) - 1)  # P(bits < thr) = p
    inv_keep = 1.0 / (1.0 - p)
    bits = jax.random.bits(jax.random.PRNGKey(seed), (B, L), dtype=jnp.uint32)

    out_flat = pl.pallas_call(
        functools.partial(_pe_add_dropout_kernel,
                          threshold=threshold, inv_keep=inv_keep),
        out_shape=out_shape,
        grid=grid,
        in_specs=[x_spec, pe_spec, x_spec],  # bits tiled identically to x
        out_specs=out_spec,
        compiler_params=cparams,
    )(x_flat, pe_flat, bits)
    return out_flat.reshape(B, S, D)


# ----------------------------------------------------------------------------
# Test
# ----------------------------------------------------------------------------
if __name__ == "__main__":
    B, S, D = 2, 8, 32
    MAX_LEN = 64
    P_DROP = 0.1

    key = jax.random.PRNGKey(0)
    x = jax.random.normal(key, (B, S, D), dtype=jnp.float32)
    pe = make_position_encoding_table(MAX_LEN, D)

    # --- eval mode (dropout == identity): must match x + pe[:S] exactly ---
    out_eval = jax.block_until_ready(
        position_encoding_forward(x, pe, drop_out=P_DROP, training=False))
    ref = x + pe[:S, :][None, :, :]
    assert out_eval.shape == (B, S, D)
    assert jnp.allclose(out_eval, ref, atol=1e-6), "eval-mode mismatch"

    # --- training mode: every element is either 0 or (x+pe)/(1-p) ---
    # NOTE: dropout is stochastic; we verify the dropout *semantics*, not a
    # specific torch RNG stream.
    out_train = jax.block_until_ready(
        position_encoding_forward(x, pe, drop_out=P_DROP, training=True, seed=123))
    scaled = ref / (1.0 - P_DROP)
    ok = jnp.all(
        jnp.isclose(out_train, 0.0, atol=1e-6) | jnp.isclose(out_train, scaled, atol=1e-5)
    )
    assert bool(ok), "training-mode dropout semantics mismatch"

    print("KERNEL_OK")
</pallas_src>

<mosaic_0001>
module attributes {stable_mosaic.version = 11 : i64} {
  func.func @_pe_add_kernel(%arg0: i32, %arg1: i32, %arg2: memref<2x256xf32, #tpu.memory_space<vmem>>, %arg3: memref<1x256xf32, #tpu.memory_space<vmem>>, %arg4: memref<2x256xf32, #tpu.memory_space<vmem>>) attributes {dimension_semantics = [#tpu.dimension_semantics<parallel>, #tpu.dimension_semantics<parallel>], iteration_bounds = array<i64: 1, 1>, scalar_prefetch = 0 : i64, scratch_operands = 0 : i64, tpu.core_type = #tpu.core_type<tc>, window_params = [{transform_indices = @transform_0, window_bounds = array<i64: 2, 256>}, {transform_indices = @transform_1, window_bounds = array<i64: 1, 256>}, {transform_indices = @transform_2, window_bounds = array<i64: 2, 256>}]} {
    %c0 = arith.constant 0 : index
    %c0_0 = arith.constant 0 : index
    %0 = vector.load %arg2[%c0, %c0_0] : memref<2x256xf32, #tpu.memory_space<vmem>>, vector<2x256xf32>
    %c0_1 = arith.constant 0 : index
    %c0_2 = arith.constant 0 : index
    %1 = vector.load %arg3[%c0_1, %c0_2] : memref<1x256xf32, #tpu.memory_space<vmem>>, vector<1x256xf32>
    %2 = vector.broadcast %1 : vector<1x256xf32> to vector<2x256xf32>
    %3 = arith.addf %0, %2 : vector<2x256xf32>
    %c0_3 = arith.constant 0 : index
    %c0_4 = arith.constant 0 : index
    %4 = vector.load %arg4[%c0_3, %c0_4] : memref<2x256xf32, #tpu.memory_space<vmem>>, vector<2x256xf32>
    tpu.vector_store %arg4[%c0_3, %c0_4], %3 {strides = array<i32>} : memref<2x256xf32, #tpu.memory_space<vmem>>, vector<2x256xf32>,
    return
  }
  func.func @transform_0(%arg0: i32, %arg1: i32) -> (i32, i32) {
    %c0_i32 = arith.constant 0 : i32
    return %arg1, %arg0 : i32, i32
  }
  func.func @transform_1(%arg0: i32, %arg1: i32) -> (i32, i32) {
    %c0_i32 = arith.constant 0 : i32
    %c0_i32_0 = arith.constant 0 : i32
    return %c0_i32, %arg0 : i32, i32
  }
  func.func @transform_2(%arg0: i32, %arg1: i32) -> (i32, i32) {
    %c0_i32 = arith.constant 0 : i32
    return %arg1, %arg0 : i32, i32
  }
}

</mosaic_0001>

<llo_original>
// kernel: tpu_custom_call.1
$region0: #{tpu_custom_call.1}
  #allocation0 [shape = 'u32[]', space=smem, size = 0x4, offset = 0x4, fixed_abs, tag = 'smem constant byte address 0x4 - core index']
  #allocation1 [shape = 'u32[144,128]{1,0:T(1,128)}', space=vmem, size = 0x12000, scoped, tag = 'internal scratch']
  %s0 = inlined_call_operand.hbm [shape: f32[2,256], index: 0, kind: input, shape index: {}]
  %s1 = inlined_call_operand.vmem [shape: f32[1,256], index: 1, kind: input, shape index: {}]
  %s2 = inlined_call_operand.hbm [shape: f32[2,256], index: 2, kind: output, shape index: {}]
  %s3 = sld [smem:[#allocation0]]
  $region22: #{tpu_custom_call.1} parent=0
    _
  %s5 = ssub.s32 1, %s3
  %s6 = scalar_select 0, %s5, %s3
  $region1: #{tpu_custom_call.1} parent=0
    #allocation2 [shape = 'u8[2048]{0}', space=vmem, size = 0x800, scoped, tag = 'input window, operand 0, single buffered']
    #allocation3 [shape = 's32[1]{0}', space=sflag, size = 0x4, scoped, tag = 'scoped memory for tpu_custom_call.1']
    #allocation4 [shape = 's32[1]{0}', space=sflag, size = 0x4, scoped, tag = 'scoped memory for tpu_custom_call.1']
    #allocation5 [shape = 'u8[2048]{0}', space=vmem, size = 0x800, scoped, tag = 'output window, operand 0, single buffered']
    %7 = vsyncpa [#allocation3], 0
    %8 = vsyncpa [#allocation4], 0
    // Predicated region
    $region2: #{tpu_custom_call.1} parent=1 // pred_check
      _
    $region3: #{tpu_custom_call.1} parent=1 // pred_check_branch
      %10 = sbr.rel (0) target = $region5
    $region4: #{tpu_custom_call.1} parent=1 // pred_region
      %s12 = ssub.s32 64, 64
      %13 = vsyncadd [#allocation3], %s12
      %s15 = sshll.u32 [#allocation2], 4
      %s16 = int_to_ptr.vmem [resolvable:$true] %s15
      %18 = dma.hbm_to_vmem [thread:$0]  %s0, 64, %s16, [#allocation3]
    $region5: #{tpu_custom_call.1} parent=1 // pred_fallthru
      _
    // Predicated region
    $region6: #{tpu_custom_call.1} parent=1 // pred_check
      _
    $region7: #{tpu_custom_call.1} parent=1 // pred_check_branch
      %20 = sbr.rel (0) target = $region9
    $region8: #{tpu_custom_call.1} parent=1 // pred_region
      _
    $region9: #{tpu_custom_call.1} parent=1 // pred_fallthru
      _
    // Predicated region
    $region10: #{tpu_custom_call.1} parent=1 // pred_check
      _
    $region11: #{tpu_custom_call.1} parent=1 // pred_check_branch
      %22 = sbr.rel (0) target = $region13
    $region12: #{tpu_custom_call.1} parent=1 // pred_region
      %23 = dma.done [#allocation3], 64
    $region13: #{tpu_custom_call.1} parent=1 // pred_fallthru
      _
    %v24 = vld [vmem:[#allocation2] sm:$0xf]
    %v25 = vld [vmem:[%s1] sm:$0x3]
    %v27 = vlaneseq
    %v28 = vshrl.u32 %v27, 7
    %v29 = vsub.s32 0, %v28
    %v30 = vrot.slane %v25, %v29
    %v31 = vlaneseq
    %v32 = vshrl.u32 %v31, 7
    %v33 = vsub.s32 1, %v32
    %v34 = vrot.slane %v25, %v33
    %v35 = vcombine.low %v30, %v34
    %v37 = vunpack.c.l.s4 1983009808
    %v38 = vunpack.c.0.s8 %v37
    %v39 = vlaneseq
    %v40 = vshrl.u32 %v39, 7
    %v41 = vsub.s32 %v38, %v40
    %v42 = vrot.slane %v35, %v41
    %v44 = vadd.f32 %v24, %v42
    %45 = vst [vmem:[#allocation5] sm:$0xf] %v44
    // Predicated region
    $region14: #{tpu_custom_call.1} parent=1 // pred_check
      _
    $region15: #{tpu_custom_call.1} parent=1 // pred_check_branch
      %47 = sbr.rel (0) target = $region17
    $region16: #{tpu_custom_call.1} parent=1 // pred_region
      %s49 = ssub.s32 64, 64
      %50 = vsyncadd [#allocation4], %s49
      %s52 = sshll.u32 [#allocation5], 4
      %s53 = int_to_ptr.vmem [resolvable:$true] %s52
      %55 = dma.vmem_to_hbm [thread:$0]  %s53, 64, %s2, [#allocation4]
    $region17: #{tpu_custom_call.1} parent=1 // pred_fallthru
      _
    // Predicated region
    $region18: #{tpu_custom_call.1} parent=1 // pred_check
      _
    $region19: #{tpu_custom_call.1} parent=1 // pred_check_branch
      %57 = sbr.rel (0) target = $region21
    $region20: #{tpu_custom_call.1} parent=1 // pred_region
      %58 = dma.done [#allocation4], 64
    $region21: #{tpu_custom_call.1} parent=1 // pred_fallthru
      _
    %59 = vsyncpa [#allocation3], 1
    %60 = vsyncpa [#allocation4], 1

</llo_original>
